<compile_context>
chip_gen: v5e
topology: v5e:2x2
jax: 0.10.0
libtpu: 0.0.40
codegen_flags: <defaults>
</compile_context>

<pallas_src>
import functools

import jax
import jax.numpy as jnp
from jax import lax
from jax.experimental import pallas as pl
from jax.experimental.pallas import tpu as pltpu


_INV_SQRT2 = 0.7071067811865476


def _gelu_exact(x):
    # PyTorch F.gelu default: exact erf formulation (kept in f32).
    return 0.5 * x * (1.0 + lax.erf(x * _INV_SQRT2))


# ---------------------------------------------------------------------------
# Kernel bodies
# ---------------------------------------------------------------------------

def _ffn_body(x, w1v, b1v, w1g, b1g, w2):
    """Linear(dim -> 2H) split into GEGLU halves, GEGLU, Linear(th -> dim)."""
    hv = jnp.dot(x, w1v, preferred_element_type=jnp.float32)
    hv = hv + b1v.astype(jnp.float32)
    hg = jnp.dot(x, w1g, preferred_element_type=jnp.float32)
    hg = hg + b1g.astype(jnp.float32)
    g = hv * _gelu_exact(hg)               # GEGLU; Dropout(p=0.0) is identity
    return jnp.dot(g.astype(w2.dtype), w2, preferred_element_type=jnp.float32)


def _apply_gate(out_f32, wg, bg, out_dtype):
    """out * sigmoid(out @ wg + bg) in f32, cast to the output dtype."""
    gate = jnp.dot(out_f32.astype(wg.dtype), wg,
                   preferred_element_type=jnp.float32)
    gate = gate + bg.astype(jnp.float32)
    return (out_f32 * jax.nn.sigmoid(gate)).astype(out_dtype)


def _ffn_gated_onepass_kernel(x_ref, w1v_ref, b1v_ref, w1g_ref, b1g_ref,
                              w2_ref, b2_ref, wg_ref, bg_ref, o_ref):
    out = _ffn_body(x_ref[...], w1v_ref[...], b1v_ref[...],
                    w1g_ref[...], b1g_ref[...], w2_ref[...])
    out = out + b2_ref[...].astype(jnp.float32)
    o_ref[...] = _apply_gate(out, wg_ref[...], bg_ref[...], o_ref.dtype)


def _ffn_onepass_kernel(x_ref, w1v_ref, b1v_ref, w1g_ref, b1g_ref,
                        w2_ref, b2_ref, o_ref):
    out = _ffn_body(x_ref[...], w1v_ref[...], b1v_ref[...],
                    w1g_ref[...], b1g_ref[...], w2_ref[...])
    o_ref[...] = (out + b2_ref[...].astype(jnp.float32)).astype(o_ref.dtype)


def _ffn_gated_accum_kernel(x_ref, w1v_ref, b1v_ref, w1g_ref, b1g_ref,
                            w2_ref, b2_ref, wg_ref, bg_ref, o_ref, acc_ref):
    h = pl.program_id(1)

    @pl.when(h == 0)
    def _init():
        acc_ref[...] = jnp.zeros_like(acc_ref)

    acc_ref[...] += _ffn_body(x_ref[...], w1v_ref[...], b1v_ref[...],
                              w1g_ref[...], b1g_ref[...], w2_ref[...])

    @pl.when(h == pl.num_programs(1) - 1)
    def _finalize():
        out = acc_ref[...] + b2_ref[...].astype(jnp.float32)
        o_ref[...] = _apply_gate(out, wg_ref[...], bg_ref[...], o_ref.dtype)


def _ffn_accum_kernel(x_ref, w1v_ref, b1v_ref, w1g_ref, b1g_ref,
                      w2_ref, b2_ref, o_ref, acc_ref):
    h = pl.program_id(1)

    @pl.when(h == 0)
    def _init():
        acc_ref[...] = jnp.zeros_like(acc_ref)

    acc_ref[...] += _ffn_body(x_ref[...], w1v_ref[...], b1v_ref[...],
                              w1g_ref[...], b1g_ref[...], w2_ref[...])

    @pl.when(h == pl.num_programs(1) - 1)
    def _finalize():
        o_ref[...] = (acc_ref[...]
                      + b2_ref[...].astype(jnp.float32)).astype(o_ref.dtype)


def _gating_kernel(out_row_ref, out_col_ref, wg_ref, bg_ref, o_ref):
    """Column-tiled gating: o[:, j] = out[:, j] * sigmoid(out @ wg[:, j] + bg[j])."""
    gate = jnp.dot(out_row_ref[...].astype(wg_ref.dtype), wg_ref[...],
                   preferred_element_type=jnp.float32)
    gate = gate + bg_ref[...].astype(jnp.float32)
    o_ref[...] = (out_col_ref[...].astype(jnp.float32)
                  * jax.nn.sigmoid(gate)).astype(o_ref.dtype)


# ---------------------------------------------------------------------------
# Planning helpers (pure Python on static shapes)
# ---------------------------------------------------------------------------

def _round_up(n, m):
    return ((n + m - 1) // m) * m


def _vmem_capacity_bytes():
    try:
        cap = getattr(pltpu.get_tpu_info(), "vmem_capacity_bytes", None)
        if cap:
            return int(cap)
    except Exception:
        pass
    return 64 * 1024 * 1024   # conservative fallback (fits any generation)


def _plan(M, D, H, act_b, w_b, budget, allow_resident=True, allow_fuse=True):
    """Pick (tm, th, Hp, weight_resident, fuse_gating) that fits `budget`."""
    sub = max(8, 32 // act_b)              # sublane packing: 8 f32 / 16 bf16 / 32 i8

    # Aim for >= 2 row tiles so v7x's two TensorCores both get work.
    if M > sub:
        tm_cap = _round_up((M + 1) // 2, sub)
    else:
        tm_cap = _round_up(M, sub)

    tm_cands = []
    for t in (1024, 512, 256, 128, 64, 32, 16, 8):
        t = _round_up(min(t, tm_cap), sub)
        if t not in tm_cands:
            tm_cands.append(t)            # already descending

    # Streaming hidden-dim tiles: keep the contraction wide; pad H if needed.
    if H <= 1024:
        th_cands_s, Hp_s = [H], H
    else:
        th_cands_s = [t for t in (1024, 512) if H % t == 0]
        Hp_s = H
        if not th_cands_s:
            Hp_s = _round_up(H, 512)
            th_cands_s = [512]

    def vmem_need(tm, th, Hp, resident, fuse):
        need = 2 * 2 * tm * D * act_b               # x + out tiles, double-buffered
        need += 3 * tm * th * 4                     # hv / hg / g f32 temporaries
        need += 2 * tm * D * 4                      # out / gate f32 temporaries
        if resident:
            need += (3 * D * Hp + 2 * Hp + D) * w_b     # w1v, w1g, w2 (+biases) once
        else:
            need += 2 * (3 * D * th + 2 * th) * w_b     # double-buffered weight tiles
            need += D * w_b                              # b2 (single-buffered)
            need += tm * D * 4                           # f32 accumulator scratch
        if fuse:
            need += (D * D + D) * w_b                    # wg + bg (single-buffered)
        return need

    modes = []
    for resident in ((True, False) if allow_resident else (False,)):
        for fuse in ((True, False) if allow_fuse else (False,)):
            modes.append((resident, fuse))

    for resident, fuse in modes:
        th_list, Hp = ([H], H) if resident else (th_cands_s, Hp_s)
        for tm in tm_cands:
            for th in th_list:
                if vmem_need(tm, th, Hp, resident, fuse) <= budget:
                    return tm, th, Hp, resident, fuse

    # Last resort: smallest row tile, streamed weights, split gating.
    return tm_cands[-1], th_cands_s[-1], Hp_s, False, False


def _plan_gate_tn(D, tm, w_b, budget):
    """Column tile for the standalone gating kernel."""
    cands = [c for c in (2048, 1024, 512, 256, 128) if D % c == 0 and c <= D]
    if D <= 2048 or not cands:
        cands = [D] + cands

    def need(tn):
        return (2 * tm * D * 4            # out row tile (f32, matmul LHS)
                + 2 * tm * tn * 4         # out column tile (f32)
                + 2 * D * tn * w_b        # wg column tile
                + 2 * tn * w_b            # bg
                + 2 * tm * tn * 4         # output tile
                + tm * tn * 4)            # gate temporary

    for tn in cands:
        if need(tn) <= budget:
            return tn
    return cands[-1]


# ---------------------------------------------------------------------------
# Public wrapper
# ---------------------------------------------------------------------------

@functools.partial(jax.jit, static_argnames=("force_split_gating",
                                              "force_streaming"))
def feedforward(x, params, force_split_gating=False, force_streaming=False):
    """x: (..., D). Returns the same shape/dtype as x."""
    w1v, b1v = params["w1v"], params["b1v"]
    w1g, b1g = params["w1g"], params["b1g"]
    w2, b2 = params["w2"], params["b2"]
    wg, bg = params["wg"], params["bg"]

    orig_shape = x.shape
    D = orig_shape[-1]
    H = w2.shape[0]                       # dim * mult

    x2 = x.reshape(-1, D)
    M = x2.shape[0]

    act_b = x2.dtype.itemsize
    w_b = w2.dtype.itemsize

    # Per-generation VMEM budget (v5e/v6e ~108 MiB, v7x ~54 MiB).
    cap = _vmem_capacity_bytes()
    budget = min(int(cap * 0.85), 108 * 1024 * 1024)
    vmem_limit = int(budget)

    tm, th, Hp, resident, fuse = _plan(
        M, D, H, act_b, w_b, budget,
        allow_resident=not force_streaming,
        allow_fuse=not force_split_gating)

    Mp = _round_up(M, tm)
    if Mp != M:
        x2 = jnp.pad(x2, ((0, Mp - M), (0, 0)))
    if Hp != H:
        ph = Hp - H                        # zero-padded hidden cols are exact
        w1v = jnp.pad(w1v, ((0, 0), (0, ph)))
        w1g = jnp.pad(w1g, ((0, 0), (0, ph)))
        b1v = jnp.pad(b1v, ((0, 0), (0, ph)))
        b1g = jnp.pad(b1g, ((0, 0), (0, ph)))
        w2 = jnp.pad(w2, ((0, ph), (0, 0)))

    gm = Mp // tm
    out_dtype = x.dtype if fuse else jnp.float32

    if resident:
        # Single pass over the hidden dim: every weight is DMA'd exactly once
        # (constant index map + pl.Buffered(1)) and stays VMEM-resident.
        row = lambda i: (i, 0)
        const2 = lambda i: (0, 0)
        wspec = lambda shape: pl.BlockSpec(shape, const2,
                                           pipeline_mode=pl.Buffered(1))
        in_specs = [
            pl.BlockSpec((tm, D), row),                 # x rows
            wspec((D, Hp)), wspec((1, Hp)),             # w1 value half (+bias)
            wspec((D, Hp)), wspec((1, Hp)),             # w1 gate half (+bias)
            wspec((Hp, D)), wspec((1, D)),              # w2, b2
        ]
        args = [x2, w1v, b1v, w1g, b1g, w2, b2]
        if fuse:
            kernel = _ffn_gated_onepass_kernel
            in_specs += [wspec((D, D)), wspec((1, D))]  # wg, bg
            args += [wg, bg]
        else:
            kernel = _ffn_onepass_kernel
        out = pl.pallas_call(
            kernel,
            out_shape=jax.ShapeDtypeStruct((Mp, D), out_dtype),
            grid=(gm,),
            in_specs=in_specs,
            out_specs=pl.BlockSpec((tm, D), row),
            compiler_params=pltpu.CompilerParams(
                dimension_semantics=("parallel",),
                vmem_limit_bytes=vmem_limit),
        )(*args)
    else:
        # Streaming fallback: hidden dim tiled, partial second-GEMM products
        # accumulate into an f32 VMEM scratch across the "arbitrary" axis.
        nh = Hp // th
        row = lambda i, h: (i, 0)
        const2 = lambda i, h: (0, 0)
        wconst = lambda shape: pl.BlockSpec(shape, const2,
                                            pipeline_mode=pl.Buffered(1))
        in_specs = [
            pl.BlockSpec((tm, D), row),                       # x rows
            pl.BlockSpec((D, th), lambda i, h: (0, h)),       # w1 value half
            pl.BlockSpec((1, th), lambda i, h: (0, h)),       # b1 value half
            pl.BlockSpec((D, th), lambda i, h: (0, h)),       # w1 gate half
            pl.BlockSpec((1, th), lambda i, h: (0, h)),       # b1 gate half
            pl.BlockSpec((th, D), lambda i, h: (h, 0)),       # w2
            wconst((1, D)),                                    # b2
        ]
        args = [x2, w1v, b1v, w1g, b1g, w2, b2]
        if fuse:
            kernel = _ffn_gated_accum_kernel
            in_specs += [wconst((D, D)), wconst((1, D))]      # wg, bg
            args += [wg, bg]
        else:
            kernel = _ffn_accum_kernel
        out = pl.pallas_call(
            kernel,
            out_shape=jax.ShapeDtypeStruct((Mp, D), out_dtype),
            grid=(gm, nh),
            in_specs=in_specs,
            out_specs=pl.BlockSpec((tm, D), row),
            scratch_shapes=[pltpu.VMEM((tm, D), jnp.float32)],
            compiler_params=pltpu.CompilerParams(
                dimension_semantics=("parallel", "arbitrary"),
                vmem_limit_bytes=vmem_limit),
        )(*args)

    if not fuse:
        # Gating as a second kernel, tiled over wg columns so the (D, D)
        # gating weight never has to be fully VMEM-resident (v7x large D).
        tn = _plan_gate_tn(D, tm, w_b, budget)
        gn = D // tn
        out = pl.pallas_call(
            _gating_kernel,
            out_shape=jax.ShapeDtypeStruct((Mp, D), x.dtype),
            grid=(gm, gn),
            in_specs=[
                pl.BlockSpec((tm, D), lambda i, j: (i, 0)),   # out rows (GEMM LHS)
                pl.BlockSpec((tm, tn), lambda i, j: (i, j)),  # out column slice
                pl.BlockSpec((D, tn), lambda i, j: (0, j)),   # wg columns
                pl.BlockSpec((1, tn), lambda i, j: (0, j)),   # bg
            ],
            out_specs=pl.BlockSpec((tm, tn), lambda i, j: (i, j)),
            compiler_params=pltpu.CompilerParams(
                dimension_semantics=("parallel", "parallel"),
                vmem_limit_bytes=vmem_limit),
        )(out, out, wg, bg)

    if Mp != M:
        out = out[:M]
    return out.reshape(orig_shape)


# ---------------------------------------------------------------------------
# Params / reference
# ---------------------------------------------------------------------------

def init_params(key, dim, mult=4, dtype=jnp.float32):
    """PyTorch-style uniform(-1/sqrt(fan_in), 1/sqrt(fan_in)) init.

    Weights are stored (in_features, out_features); the first Linear is
    pre-split into its GEGLU value / gate halves so the kernel never slices a
    (tm, 2H) intermediate along the lane axis."""
    hidden = dim * mult
    ks = jax.random.split(key, 6)

    def lin(kw, kb, fan_in, fan_out):
        bound = float(fan_in) ** -0.5
        w = jax.random.uniform(kw, (fan_in, fan_out), dtype, -bound, bound)
        b = jax.random.uniform(kb, (1, fan_out), dtype, -bound, bound)
        return w, b

    w1, b1 = lin(ks[0], ks[1], dim, hidden * 2)      # Linear(dim, dim*mult*2)
    w2, b2 = lin(ks[2], ks[3], hidden, dim)          # Linear(dim*mult, dim)
    wg, bg = lin(ks[4], ks[5], dim, dim)             # Gating Linear(dim, dim)
    return {
        "w1v": w1[:, :hidden], "b1v": b1[:, :hidden],
        "w1g": w1[:, hidden:], "b1g": b1[:, hidden:],
        "w2": w2, "b2": b2, "wg": wg, "bg": bg,
    }


def feedforward_ref(x, params):
    """Pure-JAX reference (same math as the PyTorch module)."""
    hv = x @ params["w1v"] + params["b1v"]
    hg = x @ params["w1g"] + params["b1g"]
    g = hv * _gelu_exact(hg)
    out = g @ params["w2"] + params["b2"]
    coeff = jax.nn.sigmoid(out @ params["wg"] + params["bg"])
    return out * coeff


if __name__ == "__main__":
    key = jax.random.PRNGKey(0)
    k_x, k_p = jax.random.split(key)

    batch, seq, dim, mult = 2, 8, 32, 4
    x = jax.random.normal(k_x, (batch, seq, dim), dtype=jnp.float32)
    params = init_params(k_p, dim, mult=mult)

    ref = feedforward_ref(x, params)

    # Default path (weight-resident, fused gating).
    out = jax.block_until_ready(feedforward(x, params))
    assert out.shape == x.shape and out.dtype == x.dtype
    assert jnp.allclose(out, ref, atol=2e-5, rtol=2e-5), "fused path mismatch"

    # Exercise the large-model fallback paths at small shapes too.
    out_split = jax.block_until_ready(
        feedforward(x, params, force_split_gating=True))
    assert jnp.allclose(out_split, ref, atol=2e-5, rtol=2e-5), "split gating mismatch"

    out_stream = jax.block_until_ready(
        feedforward(x, params, force_streaming=True))
    assert jnp.allclose(out_stream, ref, atol=2e-5, rtol=2e-5), "streaming mismatch"

    out_both = jax.block_until_ready(
        feedforward(x, params, force_split_gating=True, force_streaming=True))
    assert jnp.allclose(out_both, ref, atol=2e-5, rtol=2e-5), "stream+split mismatch"

    print("KERNEL_OK")
</pallas_src>

<mosaic_0001>
module attributes {stable_mosaic.version = 11 : i64} {
  func.func @_ffn_gated_onepass_kernel(%arg0: i32, %arg1: memref<8x32xf32, #tpu.memory_space<vmem>>, %arg2: memref<32x128xf32, #tpu.memory_space<vmem>>, %arg3: memref<1x128xf32, #tpu.memory_space<vmem>>, %arg4: memref<32x128xf32, #tpu.memory_space<vmem>>, %arg5: memref<1x128xf32, #tpu.memory_space<vmem>>, %arg6: memref<128x32xf32, #tpu.memory_space<vmem>>, %arg7: memref<1x32xf32, #tpu.memory_space<vmem>>, %arg8: memref<32x32xf32, #tpu.memory_space<vmem>>, %arg9: memref<1x32xf32, #tpu.memory_space<vmem>>, %arg10: memref<8x32xf32, #tpu.memory_space<vmem>>) attributes {dimension_semantics = [#tpu.dimension_semantics<parallel>], iteration_bounds = array<i64: 2>, scalar_prefetch = 0 : i64, scratch_operands = 0 : i64, tpu.core_type = #tpu.core_type<tc>, window_params = [{transform_indices = @transform_0, window_bounds = array<i64: 8, 32>}, {pipeline_mode = #tpu.pipeline_mode<synchronous>, transform_indices = @transform_1, window_bounds = array<i64: 32, 128>}, {pipeline_mode = #tpu.pipeline_mode<synchronous>, transform_indices = @transform_2, window_bounds = array<i64: 1, 128>}, {pipeline_mode = #tpu.pipeline_mode<synchronous>, transform_indices = @transform_3, window_bounds = array<i64: 32, 128>}, {pipeline_mode = #tpu.pipeline_mode<synchronous>, transform_indices = @transform_4, window_bounds = array<i64: 1, 128>}, {pipeline_mode = #tpu.pipeline_mode<synchronous>, transform_indices = @transform_5, window_bounds = array<i64: 128, 32>}, {pipeline_mode = #tpu.pipeline_mode<synchronous>, transform_indices = @transform_6, window_bounds = array<i64: 1, 32>}, {pipeline_mode = #tpu.pipeline_mode<synchronous>, transform_indices = @transform_7, window_bounds = array<i64: 32, 32>}, {pipeline_mode = #tpu.pipeline_mode<synchronous>, transform_indices = @transform_8, window_bounds = array<i64: 1, 32>}, {transform_indices = @transform_9, window_bounds = array<i64: 8, 32>}]} {
    %c0 = arith.constant 0 : index
    %c0_0 = arith.constant 0 : index
    %0 = vector.load %arg1[%c0, %c0_0] : memref<8x32xf32, #tpu.memory_space<vmem>>, vector<8x32xf32>
    %c0_1 = arith.constant 0 : index
    %c0_2 = arith.constant 0 : index
    %1 = vector.load %arg2[%c0_1, %c0_2] : memref<32x128xf32, #tpu.memory_space<vmem>>, vector<32x128xf32>
    %c0_3 = arith.constant 0 : index
    %c0_4 = arith.constant 0 : index
    %2 = vector.load %arg3[%c0_3, %c0_4] : memref<1x128xf32, #tpu.memory_space<vmem>>, vector<1x128xf32>
    %c0_5 = arith.constant 0 : index
    %c0_6 = arith.constant 0 : index
    %3 = vector.load %arg4[%c0_5, %c0_6] : memref<32x128xf32, #tpu.memory_space<vmem>>, vector<32x128xf32>
    %c0_7 = arith.constant 0 : index
    %c0_8 = arith.constant 0 : index
    %4 = vector.load %arg5[%c0_7, %c0_8] : memref<1x128xf32, #tpu.memory_space<vmem>>, vector<1x128xf32>
    %c0_9 = arith.constant 0 : index
    %c0_10 = arith.constant 0 : index
    %5 = vector.load %arg6[%c0_9, %c0_10] : memref<128x32xf32, #tpu.memory_space<vmem>>, vector<128x32xf32>
    %cst = arith.constant dense<0.000000e+00> : vector<8x128xf32>
    %6 = tpu.matmul %0, %1, %cst {dimension_numbers = #tpu.dot_dimension_numbers<[1], [0], [0], [1], [0, 0, 1, 1], [], []>} : vector<8x32xf32>, vector<32x128xf32>, vector<8x128xf32> -> vector<8x128xf32>
    %7 = vector.broadcast %2 : vector<1x128xf32> to vector<8x128xf32>
    %8 = arith.addf %6, %7 : vector<8x128xf32>
    %cst_11 = arith.constant dense<0.000000e+00> : vector<8x128xf32>
    %9 = tpu.matmul %0, %3, %cst_11 {dimension_numbers = #tpu.dot_dimension_numbers<[1], [0], [0], [1], [0, 0, 1, 1], [], []>} : vector<8x32xf32>, vector<32x128xf32>, vector<8x128xf32> -> vector<8x128xf32>
    %10 = vector.broadcast %4 : vector<1x128xf32> to vector<8x128xf32>
    %11 = arith.addf %9, %10 : vector<8x128xf32>
    %cst_12 = arith.constant 5.000000e-01 : f32
    %12 = vector.broadcast %cst_12 : f32 to vector<8x128xf32>
    %13 = arith.mulf %12, %11 : vector<8x128xf32>
    %cst_13 = arith.constant 0.707106769 : f32
    %14 = vector.broadcast %cst_13 : f32 to vector<8x128xf32>
    %15 = arith.mulf %11, %14 : vector<8x128xf32>
    %16 = math.erf %15 : vector<8x128xf32>
    %cst_14 = arith.constant 1.000000e+00 : f32
    %17 = vector.broadcast %cst_14 : f32 to vector<8x128xf32>
    %18 = arith.addf %17, %16 : vector<8x128xf32>
    %19 = arith.mulf %13, %18 : vector<8x128xf32>
    %20 = arith.mulf %8, %19 : vector<8x128xf32>
    %cst_15 = arith.constant dense<0.000000e+00> : vector<8x32xf32>
    %21 = tpu.matmul %20, %5, %cst_15 {dimension_numbers = #tpu.dot_dimension_numbers<[1], [0], [0], [1], [0, 0, 1, 1], [], []>} : vector<8x128xf32>, vector<128x32xf32>, vector<8x32xf32> -> vector<8x32xf32>
    %c0_16 = arith.constant 0 : index
    %c0_17 = arith.constant 0 : index
    %22 = vector.load %arg7[%c0_16, %c0_17] : memref<1x32xf32, #tpu.memory_space<vmem>>, vector<1x32xf32>
    %23 = vector.broadcast %22 : vector<1x32xf32> to vector<8x32xf32>
    %24 = arith.addf %21, %23 : vector<8x32xf32>
    %c0_18 = arith.constant 0 : index
    %c0_19 = arith.constant 0 : index
    %25 = vector.load %arg8[%c0_18, %c0_19] : memref<32x32xf32, #tpu.memory_space<vmem>>, vector<32x32xf32>
    %c0_20 = arith.constant 0 : index
    %c0_21 = arith.constant 0 : index
    %26 = vector.load %arg9[%c0_20, %c0_21] : memref<1x32xf32, #tpu.memory_space<vmem>>, vector<1x32xf32>
    %cst_22 = arith.constant dense<0.000000e+00> : vector<8x32xf32>
    %27 = tpu.matmul %24, %25, %cst_22 {dimension_numbers = #tpu.dot_dimension_numbers<[1], [0], [0], [1], [0, 0, 1, 1], [], []>} : vector<8x32xf32>, vector<32x32xf32>, vector<8x32xf32> -> vector<8x32xf32>
    %28 = vector.broadcast %26 : vector<1x32xf32> to vector<8x32xf32>
    %29 = arith.addf %27, %28 : vector<8x32xf32>
    %30 = arith.negf %29 : vector<8x32xf32>
    %31 = math.exp %30 : vector<8x32xf32>
    %cst_23 = arith.constant 1.000000e+00 : f32
    %32 = vector.broadcast %cst_23 : f32 to vector<8x32xf32>
    %33 = arith.addf %32, %31 : vector<8x32xf32>
    %34 = arith.divf %32, %33 : vector<8x32xf32>
    %35 = arith.mulf %24, %34 : vector<8x32xf32>
    %c0_24 = arith.constant 0 : index
    %c0_25 = arith.constant 0 : index
    %36 = vector.load %arg10[%c0_24, %c0_25] : memref<8x32xf32, #tpu.memory_space<vmem>>, vector<8x32xf32>
    tpu.vector_store %arg10[%c0_24, %c0_25], %35 {strides = array<i32>} : memref<8x32xf32, #tpu.memory_space<vmem>>, vector<8x32xf32>,
    return
  }
  func.func @transform_0(%arg0: i32) -> (i32, i32) {
    %c0_i32 = arith.constant 0 : i32
    %c0_i32_0 = arith.constant 0 : i32
    return %arg0, %c0_i32 : i32, i32
  }
  func.func @transform_1(%arg0: i32) -> (i32, i32) {
    %c0_i32 = arith.constant 0 : i32
    %c0_i32_0 = arith.constant 0 : i32
    %c0_i32_1 = arith.constant 0 : i32
    return %c0_i32, %c0_i32_0 : i32, i32
  }
  func.func @transform_2(%arg0: i32) -> (i32, i32) {
    %c0_i32 = arith.constant 0 : i32
    %c0_i32_0 = arith.constant 0 : i32
    %c0_i32_1 = arith.constant 0 : i32
    return %c0_i32, %c0_i32_0 : i32, i32
  }
  func.func @transform_3(%arg0: i32) -> (i32, i32) {
    %c0_i32 = arith.constant 0 : i32
    %c0_i32_0 = arith.constant 0 : i32
    %c0_i32_1 = arith.constant 0 : i32
    return %c0_i32, %c0_i32_0 : i32, i32
  }
  func.func @transform_4(%arg0: i32) -> (i32, i32) {
    %c0_i32 = arith.constant 0 : i32
    %c0_i32_0 = arith.constant 0 : i32
    %c0_i32_1 = arith.constant 0 : i32
    return %c0_i32, %c0_i32_0 : i32, i32
  }
  func.func @transform_5(%arg0: i32) -> (i32, i32) {
    %c0_i32 = arith.constant 0 : i32
    %c0_i32_0 = arith.constant 0 : i32
    %c0_i32_1 = arith.constant 0 : i32
    return %c0_i32, %c0_i32_0 : i32, i32
  }
  func.func @transform_6(%arg0: i32) -> (i32, i32) {
    %c0_i32 = arith.constant 0 : i32
    %c0_i32_0 = arith.constant 0 : i32
    %c0_i32_1 = arith.constant 0 : i32
    return %c0_i32, %c0_i32_0 : i32, i32
  }
  func.func @transform_7(%arg0: i32) -> (i32, i32) {
    %c0_i32 = arith.constant 0 : i32
    %c0_i32_0 = arith.constant 0 : i32
    %c0_i32_1 = arith.constant 0 : i32
    return %c0_i32, %c0_i32_0 : i32, i32
  }
  func.func @transform_8(%arg0: i32) -> (i32, i32) {
    %c0_i32 = arith.constant 0 : i32
    %c0_i32_0 = arith.constant 0 : i32
    %c0_i32_1 = arith.constant 0 : i32
    return %c0_i32, %c0_i32_0 : i32, i32
  }
  func.func @transform_9(%arg0: i32) -> (i32, i32) {
    %c0_i32 = arith.constant 0 : i32
    %c0_i32_0 = arith.constant 0 : i32
    return %arg0, %c0_i32 : i32, i32
  }
}

</mosaic_0001>

<llo_original>
// kernel: feedforward.1
$region0: #{feedforward.1}
  #allocation0 [shape = 'u32[]', space=smem, size = 0x4, offset = 0x4, fixed_abs, tag = 'smem constant byte address 0x4 - core index']
  #allocation1 [shape = 'u32[72,128]{1,0:T(1,128)}', space=vmem, size = 0x9000, scoped, tag = 'internal scratch']
  %s0 = inlined_call_operand.vmem [shape: f32[16,32], index: 0, kind: input, shape index: {}]
  %s1 = inlined_call_operand.vmem [shape: f32[32,128], index: 1, kind: input, shape index: {}]
  %s2 = inlined_call_operand.vmem [shape: f32[1,128], index: 2, kind: input, shape index: {}]
  %s3 = inlined_call_operand.vmem [shape: f32[32,128], index: 3, kind: input, shape index: {}]
  %s4 = inlined_call_operand.vmem [shape: f32[1,128], index: 4, kind: input, shape index: {}]
  %s5 = inlined_call_operand.vmem [shape: f32[128,32], index: 5, kind: input, shape index: {}]
  %s6 = inlined_call_operand.vmem [shape: f32[1,32], index: 6, kind: input, shape index: {}]
  %s7 = inlined_call_operand.vmem [shape: f32[32,32], index: 7, kind: input, shape index: {}]
  %s8 = inlined_call_operand.vmem [shape: f32[1,32], index: 8, kind: input, shape index: {}]
  %s9 = inlined_call_operand.hbm [shape: f32[16,32], index: 9, kind: output, shape index: {}]
  %s10 = sld [smem:[#allocation0]]
  $region69: #{feedforward.1} parent=0
    _
  %s12 = ssub.s32 1, %s10
  %s13 = scalar_select 0, %s12, %s10
  $region1: #{feedforward.1} parent=0
    #allocation2 [shape = 'u8[8192]{0}', space=vmem, size = 0x2000, scoped, tag = 'output window, operand 0']
    #allocation3 [shape = 's32[2]{0}', space=sflag, size = 0x8, scoped, tag = 'scoped memory for feedforward.1']
    %14 = vsyncpa [#allocation3], 0
    %s15 = scalar_lea.sflag [#allocation3], 1
    %16 = vsyncpa %s15, 0
    loop: start=0, step=1, limit=4
    $region2: #{feedforward.1} parent=1 // loop_pre_header
      _
    $region3: #{feedforward.1} parent=1 // loop_header
      %s18 = sphi 0, %s22
      %p19 = scmp.ge.s32.totalorder %s18, 4
      %s28 = sphi 0, %s30
      %s31 = sphi 0, %s28
      %s32 = sphi 0, %s31
      %s48 = sphi 0, %s32
      %s52 = sphi 0, %s52
      %s54 = sphi 0, %s52
      %s55 = sphi 0, %s54
      %s69 = sphi 0, %s55
      %s73 = sphi 0, %s73
      %s75 = sphi 0, %s73
      %s76 = sphi 0, %s75
      %s90 = sphi 0, %s76
      %s94 = sphi 0, %s94
      %s96 = sphi 0, %s94
      %s97 = sphi 0, %s96
      %s111 = sphi 0, %s97
      %s115 = sphi 0, %s115
      %s117 = sphi 0, %s115
      %s118 = sphi 0, %s117
      %s132 = sphi 0, %s118
      %s136 = sphi 0, %s136
      %s138 = sphi 0, %s136
      %s139 = sphi 0, %s138
      %s153 = sphi 0, %s139
      %s157 = sphi 0, %s157
      %s159 = sphi 0, %s157
      %s160 = sphi 0, %s159
      %s174 = sphi 0, %s160
      %s178 = sphi 0, %s178
      %s180 = sphi 0, %s178
      %s181 = sphi 0, %s180
      %s195 = sphi 0, %s181
      %s199 = sphi 0, %s199
      %s201 = sphi 0, %s199
      %s202 = sphi 0, %s201
      %s216 = sphi 0, %s202
      %s222 = sphi 0, %s224
      %s225 = sphi 0, %s222
      %s226 = sphi 0, %s225
      %s242 = sphi 0, %s226
    $region4: #{feedforward.1} parent=1 // loop_header_branch
      %21 = sbr.rel (%p19) target = $region8
    $region5: #{feedforward.1} parent=1 // loop_body
      %s23 = ssub.s32 %s18, 1
      %s24 = ssub.s32 %s18, 2
      %s25 = sadd.s32 %s18, 1
      %s26 = ssub.s32 %s18, %s25
      %p27 = scmp.eq.s32.totalorder %s26, 0
      %s29 = sadd.s32 %s28, 1
      %s30 = scalar_select %p27, %s28, %s29
      %p33 = pneg %p27
      %p34 = scmp.eq.s32.totalorder %s18, 1
      %p35 = por %p33, %p34
      %p36 = scmp.ne.s32.totalorder %s28, %s31
      %p37 = scmp.eq.s32.totalorder %s18, 0
      %p38 = por %p36, %p37
      %p39 = scmp.ne.s32.totalorder %s28, %s31
      %p40 = scmp.eq.s32.totalorder %s23, 1
      %p41 = por %p39, %p40
      %p42 = scmp.ne.s32.totalorder %s31, %s32
      %p43 = scmp.eq.s32.totalorder %s23, 0
      %p44 = por %p42, %p43
      %p45 = scmp.ne.s32.totalorder %s31, %s32
      %p46 = scmp.eq.s32.totalorder %s24, 1
      %p47 = por %p45, %p46
      %p49 = scmp.ne.s32.totalorder %s32, %s48
      %p50 = scmp.eq.s32.totalorder %s24, 0
      %p51 = por %p49, %p50
      %s53 = sadd.s32 %s52, 1
      %p56 = scmp.eq.s32.totalorder %s18, 1
      %p57 = scmp.ne.s32.totalorder %s52, %s54
      %p58 = scmp.eq.s32.totalorder %s18, 0
      %p59 = por %p57, %p58
      %p60 = scmp.ne.s32.totalorder %s52, %s54
      %p61 = scmp.eq.s32.totalorder %s23, 1
      %p62 = por %p60, %p61
      %p63 = scmp.ne.s32.totalorder %s54, %s55
      %p64 = scmp.eq.s32.totalorder %s23, 0
      %p65 = por %p63, %p64
      %p66 = scmp.ne.s32.totalorder %s54, %s55
      %p67 = scmp.eq.s32.totalorder %s24, 1
      %p68 = por %p66, %p67
      %p70 = scmp.ne.s32.totalorder %s55, %s69
      %p71 = scmp.eq.s32.totalorder %s24, 0
      %p72 = por %p70, %p71
      %s74 = sadd.s32 %s73, 1
      %p77 = scmp.eq.s32.totalorder %s18, 1
      %p78 = scmp.ne.s32.totalorder %s73, %s75
      %p79 = scmp.eq.s32.totalorder %s18, 0
      %p80 = por %p78, %p79
      %p81 = scmp.ne.s32.totalorder %s73, %s75
      %p82 = scmp.eq.s32.totalorder %s23, 1
      %p83 = por %p81, %p82
      %p84 = scmp.ne.s32.totalorder %s75, %s76
      %p85 = scmp.eq.s32.totalorder %s23, 0
      %p86 = por %p84, %p85
      %p87 = scmp.ne.s32.totalorder %s75, %s76
      %p88 = scmp.eq.s32.totalorder %s24, 1
      %p89 = por %p87, %p88
      %p91 = scmp.ne.s32.totalorder %s76, %s90
      %p92 = scmp.eq.s32.totalorder %s24, 0
      %p93 = por %p91, %p92
      %s95 = sadd.s32 %s94, 1
      %p98 = scmp.eq.s32.totalorder %s18, 1
      %p99 = scmp.ne.s32.totalorder %s94, %s96
      %p100 = scmp.eq.s32.totalorder %s18, 0
      %p101 = por %p99, %p100
      %p102 = scmp.ne.s32.totalorder %s94, %s96
      %p103 = scmp.eq.s32.totalorder %s23, 1
      %p104 = por %p102, %p103
      %p105 = scmp.ne.s32.totalorder %s96, %s97
      %p106 = scmp.eq.s32.totalorder %s23, 0
      %p107 = por %p105, %p106
      %p108 = scmp.ne.s32.totalorder %s96, %s97
      %p109 = scmp.eq.s32.totalorder %s24, 1
      %p110 = por %p108, %p109
      %p112 = scmp.ne.s32.totalorder %s97, %s111
      %p113 = scmp.eq.s32.totalorder %s24, 0
      %p114 = por %p112, %p113
      %s116 = sadd.s32 %s115, 1
      %p119 = scmp.eq.s32.totalorder %s18, 1
      %p120 = scmp.ne.s32.totalorder %s115, %s117
      %p121 = scmp.eq.s32.totalorder %s18, 0
      %p122 = por %p120, %p121
      %p123 = scmp.ne.s32.totalorder %s115, %s117
      %p124 = scmp.eq.s32.totalorder %s23, 1
      %p125 = por %p123, %p124
      %p126 = scmp.ne.s32.totalorder %s117, %s118
      %p127 = scmp.eq.s32.totalorder %s23, 0
      %p128 = por %p126, %p127
      %p129 = scmp.ne.s32.totalorder %s117, %s118
      %p130 = scmp.eq.s32.totalorder %s24, 1
      %p131 = por %p129, %p130
      %p133 = scmp.ne.s32.totalorder %s118, %s132
      %p134 = scmp.eq.s32.totalorder %s24, 0
      %p135 = por %p133, %p134
      %s137 = sadd.s32 %s136, 1
      %p140 = scmp.eq.s32.totalorder %s18, 1
      %p141 = scmp.ne.s32.totalorder %s136, %s138
      %p142 = scmp.eq.s32.totalorder %s18, 0
      %p143 = por %p141, %p142
      %p144 = scmp.ne.s32.totalorder %s136, %s138
      %p145 = scmp.eq.s32.totalorder %s23, 1
      %p146 = por %p144, %p145
      %p147 = scmp.ne.s32.totalorder %s138, %s139
      %p148 = scmp.eq.s32.totalorder %s23, 0
      %p149 = por %p147, %p148
      %p150 = scmp.ne.s32.totalorder %s138, %s139
      %p151 = scmp.eq.s32.totalorder %s24, 1
      %p152 = por %p150, %p151
      %p154 = scmp.ne.s32.totalorder %s139, %s153
      %p155 = scmp.eq.s32.totalorder %s24, 0
      %p156 = por %p154, %p155
      %s158 = sadd.s32 %s157, 1
      %p161 = scmp.eq.s32.totalorder %s18, 1
      %p162 = scmp.ne.s32.totalorder %s157, %s159
      %p163 = scmp.eq.s32.totalorder %s18, 0
      %p164 = por %p162, %p163
      %p165 = scmp.ne.s32.totalorder %s157, %s159
      %p166 = scmp.eq.s32.totalorder %s23, 1
      %p167 = por %p165, %p166
      %p168 = scmp.ne.s32.totalorder %s159, %s160
      %p169 = scmp.eq.s32.totalorder %s23, 0
      %p170 = por %p168, %p169
      %p171 = scmp.ne.s32.totalorder %s159, %s160
      %p172 = scmp.eq.s32.totalorder %s24, 1
      %p173 = por %p171, %p172
      %p175 = scmp.ne.s32.totalorder %s160, %s174
      %p176 = scmp.eq.s32.totalorder %s24, 0
      %p177 = por %p175, %p176
      %s179 = sadd.s32 %s178, 1
      %p182 = scmp.eq.s32.totalorder %s18, 1
      %p183 = scmp.ne.s32.totalorder %s178, %s180
      %p184 = scmp.eq.s32.totalorder %s18, 0
      %p185 = por %p183, %p184
      %p186 = scmp.ne.s32.totalorder %s178, %s180
      %p187 = scmp.eq.s32.totalorder %s23, 1
      %p188 = por %p186, %p187
      %p189 = scmp.ne.s32.totalorder %s180, %s181
      %p190 = scmp.eq.s32.totalorder %s23, 0
      %p191 = por %p189, %p190
      %p192 = scmp.ne.s32.totalorder %s180, %s181
      %p193 = scmp.eq.s32.totalorder %s24, 1
      %p194 = por %p192, %p193
      %p196 = scmp.ne.s32.totalorder %s181, %s195
      %p197 = scmp.eq.s32.totalorder %s24, 0
      %p198 = por %p196, %p197
      %s200 = sadd.s32 %s199, 1
      %p203 = scmp.eq.s32.totalorder %s18, 1
      %p204 = scmp.ne.s32.totalorder %s199, %s201
      %p205 = scmp.eq.s32.totalorder %s18, 0
      %p206 = por %p204, %p205
      %p207 = scmp.ne.s32.totalorder %s199, %s201
      %p208 = scmp.eq.s32.totalorder %s23, 1
      %p209 = por %p207, %p208
      %p210 = scmp.ne.s32.totalorder %s201, %s202
      %p211 = scmp.eq.s32.totalorder %s23, 0
      %p212 = por %p210, %p211
      %p213 = scmp.ne.s32.totalorder %s201, %s202
      %p214 = scmp.eq.s32.totalorder %s24, 1
      %p215 = por %p213, %p214
      %p217 = scmp.ne.s32.totalorder %s202, %s216
      %p218 = scmp.eq.s32.totalorder %s24, 0
      %p219 = por %p217, %p218
      %s220 = ssub.s32 %s18, %s25
      %p221 = scmp.eq.s32.totalorder %s220, 0
      %s223 = sadd.s32 %s222, 1
      %s224 = scalar_select %p221, %s222, %s223
      %p227 = pneg %p221
      %p228 = scmp.eq.s32.totalorder %s18, 1
      %p229 = por %p227, %p228
      %p230 = scmp.ne.s32.totalorder %s222, %s225
      %p231 = scmp.eq.s32.totalorder %s18, 0
      %p232 = por %p230, %p231
      %p233 = scmp.ne.s32.totalorder %s222, %s225
      %p234 = scmp.eq.s32.totalorder %s23, 1
      %p235 = por %p233, %p234
      %p236 = scmp.ne.s32.totalorder %s225, %s226
      %p237 = scmp.eq.s32.totalorder %s23, 0
      %p238 = por %p236, %p237
      %p239 = scmp.ne.s32.totalorder %s225, %s226
      %p240 = scmp.eq.s32.totalorder %s24, 1
      %p241 = por %p239, %p240
      %p243 = scmp.ne.s32.totalorder %s226, %s242
      %p244 = scmp.eq.s32.totalorder %s24, 0
      %p245 = por %p243, %p244
      %p246 = scmp.le.s32.totalorder 1, %s18
      %p247 = scmp.lt.s32.totalorder %s18, 3
      %p248 = pnand %p246, %p247
      %p249 = pneg %p248
      // Predicated region
      $region9: #{feedforward.1} parent=5 // pred_check
        _
      $region10: #{feedforward.1} parent=5 // pred_check_branch
        %251 = sbr.rel (%p248) target = $region12
      $region11: #{feedforward.1} parent=5 // pred_region
        %s252 = ssub.s32 %s18, 1
        // Predicated region
        $region13: #{feedforward.1} parent=11 // pred_check
          %p253 = pneg %p65
        $region14: #{feedforward.1} parent=11 // pred_check_branch
          %255 = sbr.rel (%p253) target = $region16
        $region15: #{feedforward.1} parent=11 // pred_region
          _
        $region16: #{feedforward.1} parent=11 // pred_fallthru
          _
        // Predicated region
        $region17: #{feedforward.1} parent=11 // pred_check
          %p256 = pneg %p86
        $region18: #{feedforward.1} parent=11 // pred_check_branch
          %258 = sbr.rel (%p256) target = $region20
        $region19: #{feedforward.1} parent=11 // pred_region
          _
        $region20: #{feedforward.1} parent=11 // pred_fallthru
          _
        // Predicated region
        $region21: #{feedforward.1} parent=11 // pred_check
          %p259 = pneg %p107
        $region22: #{feedforward.1} parent=11 // pred_check_branch
          %261 = sbr.rel (%p259) target = $region24
        $region23: #{feedforward.1} parent=11 // pred_region
          _
        $region24: #{feedforward.1} parent=11 // pred_fallthru
          _
        // Predicated region
        $region25: #{feedforward.1} parent=11 // pred_check
          %p262 = pneg %p128
        $region26: #{feedforward.1} parent=11 // pred_check_branch
          %264 = sbr.rel (%p262) target = $region28
        $region27: #{feedforward.1} parent=11 // pred_region
          _
        $region28: #{feedforward.1} parent=11 // pred_fallthru
          _
        // Predicated region
        $region29: #{feedforward.1} parent=11 // pred_check
          %p265 = pneg %p149
        $region30: #{feedforward.1} parent=11 // pred_check_branch
          %267 = sbr.rel (%p265) target = $region32
        $region31: #{feedforward.1} parent=11 // pred_region
          _
        $region32: #{feedforward.1} parent=11 // pred_fallthru
          _
        // Predicated region
        $region33: #{feedforward.1} parent=11 // pred_check
          %p268 = pneg %p170
        $region34: #{feedforward.1} parent=11 // pred_check_branch
          %270 = sbr.rel (%p268) target = $region36
        $region35: #{feedforward.1} parent=11 // pred_region
          _
        $region36: #{feedforward.1} parent=11 // pred_fallthru
          _
        // Predicated region
        $region37: #{feedforward.1} parent=11 // pred_check
          %p271 = pneg %p191
        $region38: #{feedforward.1} parent=11 // pred_check_branch
          %273 = sbr.rel (%p271) target = $region40
        $region39: #{feedforward.1} parent=11 // pred_region
          _
        $region40: #{feedforward.1} parent=11 // pred_fallthru
          _
        // Predicated region
        $region41: #{feedforward.1} parent=11 // pred_check
          %p274 = pneg %p212
        $region42: #{feedforward.1} parent=11 // pred_check_branch
          %276 = sbr.rel (%p274) target = $region44
        $region43: #{feedforward.1} parent=11 // pred_region
          _
        $region44: #{feedforward.1} parent=11 // pred_fallthru
          _
      $region12: #{feedforward.1} parent=5 // pred_fallthru
        _
      %p277 = scmp.lt.s32.totalorder %s18, 2
      // Predicated region
      $region45: #{feedforward.1} parent=5 // pred_check
        %p278 = pneg %p277
      $region46: #{feedforward.1} parent=5 // pred_check_branch
        %280 = sbr.rel (%p278) target = $region48
      $region47: #{feedforward.1} parent=5 // pred_region
        // Predicated region
        $region49: #{feedforward.1} parent=47 // pred_check
          %p281 = pneg %p38
        $region50: #{feedforward.1} parent=47 // pred_check_branch
          %283 = sbr.rel (%p281) target = $region52
        $region51: #{feedforward.1} parent=47 // pred_region
          %p284 = scmp.lt.s32.totalorder %s18, 1
          %s285 = scalar_select %p284, %s18, 1
          %s286 = smul.addr %s285, 8
          %s287 = scalar_lea.vmem %s0, %s286
        $region52: #{feedforward.1} parent=47 // pred_fallthru
          _
      $region48: #{feedforward.1} parent=5 // pred_fallthru
        _
      %p288 = scmp.le.s32.totalorder 1, %s18
      %p289 = scmp.lt.s32.totalorder %s18, 3
      %p290 = pnand %p288, %p289
      %p291 = pneg %p290
      // Predicated region
      $region53: #{feedforward.1} parent=5 // pred_check
        _
      $region54: #{feedforward.1} parent=5 // pred_check_branch
        %293 = sbr.rel (%p290) target = $region56
      $region55: #{feedforward.1} parent=5 // pred_region
        %s294 = ssub.s32 %s18, 1
        %p295 = scmp.lt.s32.totalorder %s23, 1
        %s296 = scalar_select %p295, %s23, 1
        %s297 = smul.addr %s296, 8
        %s298 = scalar_lea.vmem %s0, %s297
        %p299 = pneg %p44
        %p300 = pneg %p41
        %p301 = pneg %p65
        %p302 = pneg %p62
        %p303 = pneg %p86
        %p304 = pneg %p83
        %p305 = pneg %p107
        %p306 = pneg %p104
        %p307 = pneg %p128
        %p308 = pneg %p125
        %p309 = pneg %p149
        %p310 = pneg %p146
        %p311 = pneg %p170
        %p312 = pneg %p167
        %p313 = pneg %p191
        %p314 = pneg %p188
        %p315 = pneg %p212
        %p316 = pneg %p209
        %p317 = pneg %p238
        %p318 = pneg %p235
        %s319 = sand.u32 %s225, 1
        %s320 = scalar_lea.sflag [#allocation3], %s319
        %s321 = sand.u32 %s225, 1
        %s322 = smul.addr %s321, 8
        %s323 = scalar_lea.vmem [#allocation2], %s322
        %p324 = scmp.lt.s32.totalorder %s23, 1
        %s325 = scalar_select %p324, %s23, 1
        %s326 = smul.addr %s325, 8
        %s327 = scalar_lea.vmem %s0, %s326
        %v328 = vld [vmem:[%s327] sm:$0xff]
        %v329 = vld [vmem:[%s1] sm:$0xff]
        %v330 = vld [vmem:[%s1 + $0x8] sm:$0xff]
        %v331 = vld [vmem:[%s1 + $0x10] sm:$0xff]
        %v332 = vld [vmem:[%s1 + $0x18] sm:$0xff]
        %v333 = vld [vmem:[%s2] sm:$0x1]
        %v334 = vld [vmem:[%s3] sm:$0xff]
        %v335 = vld [vmem:[%s3 + $0x8] sm:$0xff]
        %v336 = vld [vmem:[%s3 + $0x10] sm:$0xff]
        %v337 = vld [vmem:[%s3 + $0x18] sm:$0xff]
        %v338 = vld [vmem:[%s4] sm:$0x1]
        %v339 = vld [vmem:[%s5] sm:$0xff]
        %v340 = vld [vmem:[%s5 + $0x8] sm:$0xff]
        %v341 = vld [vmem:[%s5 + $0x10] sm:$0xff]
        %v342 = vld [vmem:[%s5 + $0x18] sm:$0xff]
        %v343 = vld [vmem:[%s5 + $0x20] sm:$0xff]
        %v344 = vld [vmem:[%s5 + $0x28] sm:$0xff]
        %v345 = vld [vmem:[%s5 + $0x30] sm:$0xff]
        %v346 = vld [vmem:[%s5 + $0x38] sm:$0xff]
        %v347 = vld [vmem:[%s5 + $0x40] sm:$0xff]
        %v348 = vld [vmem:[%s5 + $0x48] sm:$0xff]
        %v349 = vld [vmem:[%s5 + $0x50] sm:$0xff]
        %v350 = vld [vmem:[%s5 + $0x58] sm:$0xff]
        %v351 = vld [vmem:[%s5 + $0x60] sm:$0xff]
        %v352 = vld [vmem:[%s5 + $0x68] sm:$0xff]
        %v353 = vld [vmem:[%s5 + $0x70] sm:$0xff]
        %v354 = vld [vmem:[%s5 + $0x78] sm:$0xff]
        %v356 = vperm.slane %v333, 0
        %vm358 = vcmask 261120
        %v360 = vsel %vm358, %v328, 0
        %362 = vmatpush.msra.mxu0 0.0
        %363 = vmatpush.msra.mxu0 0.0
        %364 = vmatpush.msra.mxu0 0.0
        %365 = vmatpush.msra.mxu0 0.0
        %366 = vmatpush.msra.mxu0 0.0
        %367 = vmatpush.msra.mxu0 0.0
        %368 = vmatpush.msra.mxu0 0.0
        %369 = vmatpush.msra.mxu0 0.0
        %370 = vmatpush.msra.mxu0 0.0
        %371 = vmatpush.msra.mxu0 0.0
        %372 = vmatpush.msra.mxu0 0.0
        %373 = vmatpush.msra.mxu0 0.0
        %374 = vmatpush.msra.mxu0 %v332
        %375 = vmatpush.msra.mxu0 %v331
        %376 = vmatpush.msra.mxu0 %v330
        %377 = vmatpush.msra.mxu0 %v329
        %378 = vmatmul.f32.gmra.mxu0 %v360
        %v379 = vpop.f32.mrf.mxu0
        %v380 = vadd.f32 %v356, %v379
        %381 = vdwg.mxu0
        %v383 = vperm.slane %v338, 0
        %385 = vmatpush.msra.mxu0 0.0
        %386 = vmatpush.msra.mxu0 0.0
        %387 = vmatpush.msra.mxu0 0.0
        %388 = vmatpush.msra.mxu0 0.0
        %389 = vmatpush.msra.mxu0 0.0
        %390 = vmatpush.msra.mxu0 0.0
        %391 = vmatpush.msra.mxu0 0.0
        %392 = vmatpush.msra.mxu0 0.0
        %393 = vmatpush.msra.mxu0 0.0
        %394 = vmatpush.msra.mxu0 0.0
        %395 = vmatpush.msra.mxu0 0.0
        %396 = vmatpush.msra.mxu0 0.0
        %397 = vmatpush.msra.mxu0 %v337
        %398 = vmatpush.msra.mxu0 %v336
        %399 = vmatpush.msra.mxu0 %v335
        %400 = vmatpush.msra.mxu0 %v334
        %401 = vmatmul.f32.gmra.mxu0 %v360
        %v402 = vpop.f32.mrf.mxu0
        %v403 = vadd.f32 %v383, %v402
        %404 = vdwg.mxu0
        %v405 = vmul.f32 %v403, 0.5
        %v406 = vmul.f32 %v403, 0.70710677
        %v407 = vmul.f32 %v406, %v406
        %v408 = vmin.f32 16.0, %v407
        %v409 = vmul.f32 %v408, 2.1237322e-06
        %v410 = vadd.f32 %v409, 0.00028619796
        %v411 = vmul.f32 %v408, %v410
        %v412 = vadd.f32 %v411, 0.0036580483
        %v413 = vmul.f32 %v408, %v412
        %v414 = vadd.f32 %v413, 0.05243302
        %v415 = vmul.f32 %v408, %v414
        %v416 = vadd.f32 %v415, 0.18741608
        %v417 = vmul.f32 %v408, %v416
        %v418 = vadd.f32 %v417, 1.1283791
        %v419 = vmul.f32 %v406, %v418
        %v420 = vmul.f32 %v408, 3.8918573e-05
        %v421 = vadd.f32 %v420, 0.001143296
        %v422 = vmul.f32 %v408, %v421
        %v423 = vadd.f32 %v422, 0.014752088
        %v424 = vmul.f32 %v408, %v423
        %v425 = vadd.f32 %v424, 0.112945676
        %v426 = vmul.f32 %v408, %v425
        %v427 = vadd.f32 %v426, 0.4994258
        %v428 = vmul.f32 %v408, %v427
        %v429 = vadd.f32 %v428, 1.0
        %v430 = vrcp.pop %v429
        %v431 = vmul.f32 %v429, %v430
        %v432 = vsub.f32 1.0, %v431
        %v433 = vmul.f32 %v430, %v432
        %v434 = vadd.f32 %v430, %v433
        %vm435 = vweird.f32 %v429
        %vm436 = vweird.f32 %v430
        %vm437 = vmor %vm435, %vm436
        %v438 = vsel %vm437, %v430, %v434
        %v439 = vand.u32 2147483647, %v429
        %vm440 = vcmp.eq.f32.partialorder %v439, 8.507059e+37
        %v441 = vand.u32 %v429, 2147483648
        %v442 = vor.u32 1.1754944e-38, %v441
        %v443 = vsel %vm440, %v442, %v438
        %v444 = vmul.f32 %v419, %v443
        %v445 = vmin.f32 %v444, 1.0
        %v446 = vmax.f32 %v445, -1.0
        %v447 = vadd.f32 %v446, 1.0
        %v448 = vmul.f32 %v405, %v447
        %v449 = vmul.f32 %v380, %v448
        %v450 = vld [vmem:[%s6] sm:$0x1]
        %v452 = vperm.slane %v450, 0
        %454 = vmatpush.msra.mxu0 %v354
        %455 = vmatpush.msra.mxu0 %v353
        %456 = vmatpush.msra.mxu0 %v352
        %457 = vmatpush.msra.mxu0 %v351
        %458 = vmatpush.msra.mxu0 %v350
        %459 = vmatpush.msra.mxu0 %v349
        %460 = vmatpush.msra.mxu0 %v348
        %461 = vmatpush.msra.mxu0 %v347
        %462 = vmatpush.msra.mxu0 %v346
        %463 = vmatpush.msra.mxu0 %v345
        %464 = vmatpush.msra.mxu0 %v344
        %465 = vmatpush.msra.mxu0 %v343
        %466 = vmatpush.msra.mxu0 %v342
        %467 = vmatpush.msra.mxu0 %v341
        %468 = vmatpush.msra.mxu0 %v340
        %469 = vmatpush.msra.mxu0 %v339
        %470 = vmatmul.f32.gmra.mxu0 %v449
        %v471 = vpop.f32.mrf.mxu0
        %v472 = vadd.f32 %v452, %v471
        %473 = vdwg.mxu0
        %v474 = vld [vmem:[%s7] sm:$0xff]
        %v475 = vld [vmem:[%s7 + $0x8] sm:$0xff]
        %v476 = vld [vmem:[%s7 + $0x10] sm:$0xff]
        %v477 = vld [vmem:[%s7 + $0x18] sm:$0xff]
        %v478 = vld [vmem:[%s8] sm:$0x1]
        %v480 = vperm.slane %v478, 0
        %v483 = vsel %vm358, %v472, 0
        %485 = vmatpush.msra.mxu0 0.0
        %486 = vmatpush.msra.mxu0 0.0
        %487 = vmatpush.msra.mxu0 0.0
        %488 = vmatpush.msra.mxu0 0.0
        %489 = vmatpush.msra.mxu0 0.0
        %490 = vmatpush.msra.mxu0 0.0
        %491 = vmatpush.msra.mxu0 0.0
        %492 = vmatpush.msra.mxu0 0.0
        %493 = vmatpush.msra.mxu0 0.0
        %494 = vmatpush.msra.mxu0 0.0
        %495 = vmatpush.msra.mxu0 0.0
        %496 = vmatpush.msra.mxu0 0.0
        %497 = vmatpush.msra.mxu0 %v477
        %498 = vmatpush.msra.mxu0 %v476
        %499 = vmatpush.msra.mxu0 %v475
        %500 = vmatpush.msra.mxu0 %v474
        %501 = vmatmul.f32.gmra.mxu0 %v483
        %v502 = vpop.f32.mrf.mxu0
        %v503 = vadd.f32 %v480, %v502
        %504 = vdwg.mxu0
        %v505 = vxor.u32 %v503, 2147483648
        %v506 = vmul.f32 %v505, 1.442695
        %v507 = vpow.pop %v506
        %v508 = vadd.f32 %v507, 1.0
        %v509 = vrcp.pop %v508
        %v510 = vmul.f32 %v508, %v509
        %v511 = vsub.f32 1.0, %v510
        %v512 = vmul.f32 %v509, %v511
        %v513 = vadd.f32 %v509, %v512
        %vm514 = vweird.f32 %v508
        %vm515 = vweird.f32 %v509
        %vm516 = vmor %vm514, %vm515
        %v517 = vsel %vm516, %v509, %v513
        %v518 = vand.u32 2147483647, %v508
        %vm519 = vcmp.eq.f32.partialorder %v518, 8.507059e+37
        %v520 = vand.u32 %v508, 2147483648
        %v521 = vor.u32 1.1754944e-38, %v520
        %v522 = vsel %vm519, %v521, %v517
        %v523 = vmul.f32 1.0, %v522
        %v524 = vmul.f32 %v472, %v523
        %525 = vst.msk [vmem:[%s323] sm:$0xff] %vm358, %v524
        %s526 = sand.u32 %s225, 1
        %s527 = scalar_lea.sflag [#allocation3], %s526
        %s528 = sand.u32 %s225, 1
        %s529 = smul.addr %s528, 8
        %s530 = scalar_lea.vmem [#allocation2], %s529
        // Predicated region
        $region57: #{feedforward.1} parent=55 // pred_check
          %p531 = pneg %p235
        $region58: #{feedforward.1} parent=55 // pred_check_branch
          %533 = sbr.rel (%p531) target = $region60
        $region59: #{feedforward.1} parent=55 // pred_region
          %535 = vsyncadd %s527, 0
          %s536 = smul.addr %s23, 8
          %s537 = scalar_lea.hbm %s9, %s536
          %s539 = sshll.u32 %s530, 4
          %s540 = int_to_ptr.vmem [resolvable:$true] %s539
          %s541 = sshll.u32 %s537, 4
          %s542 = int_to_ptr.hbm [resolvable:$true] %s541
          %544 = dma.vmem_to_hbm [thread:$0]  %s540, 128, %s542, %s527
        $region60: #{feedforward.1} parent=55 // pred_fallthru
          _
      $region56: #{feedforward.1} parent=5 // pred_fallthru
        _
      %p545 = scmp.le.s32.totalorder 2, %s18
      // Predicated region
      $region61: #{feedforward.1} parent=5 // pred_check
        %p546 = pneg %p545
      $region62: #{feedforward.1} parent=5 // pred_check_branch
        %548 = sbr.rel (%p546) target = $region64
      $region63: #{feedforward.1} parent=5 // pred_region
        %s549 = ssub.s32 %s18, 2
        // Predicated region
        $region65: #{feedforward.1} parent=63 // pred_check
          %p550 = pneg %p241
        $region66: #{feedforward.1} parent=63 // pred_check_branch
          %552 = sbr.rel (%p550) target = $region68
        $region67: #{feedforward.1} parent=63 // pred_region
          %s553 = sand.u32 %s226, 1
          %s554 = scalar_lea.sflag [#allocation3], %s553
          %s555 = sand.u32 %s226, 1
          %s556 = smul.addr %s555, 8
          %s557 = scalar_lea.vmem [#allocation2], %s556
          %559 = dma.done %s554, 128
        $region68: #{feedforward.1} parent=63 // pred_fallthru
          _
      $region64: #{feedforward.1} parent=5 // pred_fallthru
        _
    $region6: #{feedforward.1} parent=1 // loop_footer
      %s22 = sadd.s32 1, %s18
    $region7: #{feedforward.1} parent=1 // loop_footer_branch
      %17 = sbr.rel target = $region3
    $region8: #{feedforward.1} parent=1 // loop_exit
      _
    %560 = vsyncpa [#allocation3], 1
    %s561 = scalar_lea.sflag [#allocation3], 1
    %562 = vsyncpa %s561, 1

</llo_original>
